<compile_context>
chip_gen: v6e
topology: v6e:2x2x1
jax: 0.10.0
libtpu: 0.0.40
codegen_flags: <defaults>
</compile_context>

<pallas_src>
import functools

import jax
import jax.numpy as jnp
from jax.experimental import pallas as pl
from jax.experimental.pallas import tpu as pltpu


_VMEM_LIMIT_BYTES = 40 * 1024 * 1024   # explicit scoped-VMEM budget (raise v5e's ~16 MiB default)
_APPLY_BLOCK_BYTES = 4 * 1024 * 1024   # per-x-block budget for the apply pass (in + out streams)
_STATS_BLOCK_BYTES = 8 * 1024 * 1024   # per-x-block budget for the stats pass (single big stream)
_STATS_MAX_BC = 8192                   # multiple of 128; bounds lane-group unroll to <= 64 segments


def _sublane(dtype):
    # Native sublane multiple: 8 (f32), 16 (bf16/f16), 32 (int8/fp8).
    return max(8, 32 // max(jnp.dtype(dtype).itemsize, 1))


# ----------------------------------------------------------------------------
# Kernels
# ----------------------------------------------------------------------------
def _bn_apply_kernel(x_ref, scale_ref, bias_ref, o_ref):
    # x_ref/o_ref: (br, bc).  scale_ref/bias_ref are either (br, 1) (per-row
    # channel params) or (1, bc) (per-lane params, flat view) f32 blocks;
    # jnp broadcasting handles both layouts with the same kernel.
    x = x_ref[...].astype(jnp.float32)
    o_ref[...] = (x * scale_ref[...] + bias_ref[...]).astype(o_ref.dtype)


def _bn_stats_kernel(x_ref, pivot_ref, sum_ref, sq_ref, *, s_total, block_cols, acc_w):
    # Per-row shifted sum / sum-of-squares, accumulated across the column grid
    # axis into lane-dense (br, acc_w) f32 accumulators (acc_w = 128 when the
    # block width is a multiple of 128, else 1 for tiny single-block widths).
    j = pl.program_id(1)

    @pl.when(j == 0)
    def _():
        sum_ref[...] = jnp.zeros_like(sum_ref)
        sq_ref[...] = jnp.zeros_like(sq_ref)

    def accumulate(xv):
        x2 = xv * xv
        if acc_w == 1:
            # Small-S path: single column block, one-shot cross-lane reduce.
            sum_ref[...] += jnp.sum(xv, axis=1, keepdims=True)
            sq_ref[...] += jnp.sum(x2, axis=1, keepdims=True)
        else:
            # Lane-dense path: VPU-only adds of vreg-aligned 128-lane groups.
            nseg = block_cols // acc_w
            s1 = xv[:, 0:acc_w]
            s2 = x2[:, 0:acc_w]
            for k in range(1, nseg):
                lo = k * acc_w
                s1 = s1 + xv[:, lo:lo + acc_w]
                s2 = s2 + x2[:, lo:lo + acc_w]
            sum_ref[...] += s1
            sq_ref[...] += s2

    # Shifted by a per-row pivot (running_mean) for numerical robustness of
    # the E[x^2] - mean^2 variance formula.
    x = x_ref[...].astype(jnp.float32) - pivot_ref[...]

    if s_total % block_cols != 0:  # static (trace-time) check
        last = pl.num_programs(1) - 1

        @pl.when(j == last)           # mask only the ragged tail block
        def _():
            col = jax.lax.broadcasted_iota(jnp.int32, x.shape, 1) + j * block_cols
            accumulate(jnp.where(col < s_total, x, 0.0))

        @pl.when(j != last)           # interior blocks: unmasked fast path
        def _():
            accumulate(x)
    else:
        accumulate(x)


# ----------------------------------------------------------------------------
# Block sizing
# ----------------------------------------------------------------------------
def _choose_apply_blocks(R, S, dtype):
    dtype = jnp.dtype(dtype)
    sub = _sublane(dtype)
    item = dtype.itemsize
    if S * item * sub <= _APPLY_BLOCK_BYTES:
        bc = S                                    # full trailing dim: always legal
    else:
        bc = max(128, (_APPLY_BLOCK_BYTES // (sub * item)) // 128 * 128)
    rows_fit = max(sub, _APPLY_BLOCK_BYTES // max(bc * item, 1))
    br = min(rows_fit, R, 2048)
    if br < R:
        br = max(sub, (br // sub) * sub)          # dtype-native sublane multiple
    return br, bc


def _choose_stats_blocks(R, S, dtype):
    dtype = jnp.dtype(dtype)
    sub = _sublane(dtype)
    item = dtype.itemsize
    if S <= _STATS_MAX_BC:
        bc = S                                    # single column block, no tail at all
    else:
        bc = _STATS_MAX_BC                        # multiple of 128; tail masked via pl.when
    acc_w = 128 if bc % 128 == 0 else 1
    rows_fit = max(sub, _STATS_BLOCK_BYTES // max(bc * item, 1))
    br = min(rows_fit, R, 2048)
    if br < R:
        br = max(sub, (br // sub) * sub)
    # Rows is the only "parallel" axis of this kernel: keep >= 2 row blocks so
    # both v7x TensorCores get work whenever the row count allows it.
    if R >= 2 * sub:
        cap = max(sub, ((R // 2) // sub) * sub)
        br = min(br, cap)
    return br, bc, acc_w


# ----------------------------------------------------------------------------
# pallas_call wrappers
# ----------------------------------------------------------------------------
def _bn_apply(x2d, scale_2d, bias_2d, scale_block):
    """Elementwise y = x*scale + bias.  scale/bias are (R,1) or (1,Scols) f32."""
    R, S = x2d.shape
    br, bc = _choose_apply_blocks(R, S, x2d.dtype)
    grid = (pl.cdiv(R, br), pl.cdiv(S, bc))
    if scale_block == "row":
        sb_shape = (br, 1)
        sb_map = lambda i, j: (i, 0)
    else:  # per-lane params (flat view)
        sb_shape = (1, bc)
        sb_map = lambda i, j: (0, j)
    return pl.pallas_call(
        _bn_apply_kernel,
        out_shape=jax.ShapeDtypeStruct((R, S), x2d.dtype),
        grid=grid,
        in_specs=[
            pl.BlockSpec((br, bc), lambda i, j: (i, j)),
            pl.BlockSpec(sb_shape, sb_map),
            pl.BlockSpec(sb_shape, sb_map),
        ],
        out_specs=pl.BlockSpec((br, bc), lambda i, j: (i, j)),
        compiler_params=pltpu.CompilerParams(
            dimension_semantics=("parallel", "parallel"),
            vmem_limit_bytes=_VMEM_LIMIT_BYTES),
    )(x2d, scale_2d, bias_2d)


def _batch_stats(x2d, running_mean, N, C, S):
    """Per-channel mean / biased variance over (N, H, W), via shifted sums."""
    R = N * C
    br, bc, acc_w = _choose_stats_blocks(R, S, x2d.dtype)
    pivot_c = running_mean.astype(jnp.float32)
    pivot_rows = jnp.tile(pivot_c, (N,)).reshape(R, 1)   # row order is n*C + c
    grid = (pl.cdiv(R, br), pl.cdiv(S, bc))
    kern = functools.partial(_bn_stats_kernel, s_total=S, block_cols=bc, acc_w=acc_w)
    sums, sqs = pl.pallas_call(
        kern,
        out_shape=(
            jax.ShapeDtypeStruct((R, acc_w), jnp.float32),
            jax.ShapeDtypeStruct((R, acc_w), jnp.float32),
        ),
        grid=grid,
        in_specs=[
            pl.BlockSpec((br, bc), lambda i, j: (i, j)),
            pl.BlockSpec((br, 1), lambda i, j: (i, 0)),
        ],
        out_specs=(
            pl.BlockSpec((br, acc_w), lambda i, j: (i, 0)),
            pl.BlockSpec((br, acc_w), lambda i, j: (i, 0)),
        ),
        compiler_params=pltpu.CompilerParams(
            dimension_semantics=("parallel", "arbitrary"),
            vmem_limit_bytes=_VMEM_LIMIT_BYTES),
    )(x2d, pivot_rows)

    count = N * S
    per_c_sum = sums.sum(axis=1).reshape(N, C).sum(axis=0)   # sum of (x - pivot_c)
    per_c_sq = sqs.sum(axis=1).reshape(N, C).sum(axis=0)     # sum of (x - pivot_c)^2
    ex = per_c_sum / count
    mean = pivot_c + ex
    var = jnp.maximum(per_c_sq / count - ex * ex, 0.0)        # biased variance
    return mean, var


def vmap_batch_norm_forward(x, gamma, beta, running_mean, running_var, *,
                            eps=1e-5, momentum=0.1, training=False):
    """Forward of VmapBatchNorm(BatchNorm2d). Returns (y, new_rmean, new_rvar)."""
    squeeze = False
    if x.ndim == 3:
        # VmapBatchNorm fallback: BatchNorm2d raises ValueError on 3-D input;
        # in eval mode the wrapper retries with a leading batch dim.
        if training:
            raise ValueError("expected 4D input (got 3D input)")
        x = x[None]
        squeeze = True
    N, C, H, W = x.shape
    S = H * W
    R = N * C

    if training:
        mean, var = _batch_stats(x.reshape(R, S), running_mean, N, C, S)
        count = N * S
        unbiased = var * (count / max(count - 1, 1))
        new_rmean = ((1.0 - momentum) * running_mean.astype(jnp.float32)
                     + momentum * mean).astype(running_mean.dtype)
        new_rvar = ((1.0 - momentum) * running_var.astype(jnp.float32)
                    + momentum * unbiased).astype(running_var.dtype)
    else:
        mean = running_mean.astype(jnp.float32)
        var = running_var.astype(jnp.float32)
        new_rmean, new_rvar = running_mean, running_var

    # Fold mean/var/gamma/beta into per-channel scale & bias (size-C math).
    scale = gamma.astype(jnp.float32) * jax.lax.rsqrt(var + eps)
    bias = beta.astype(jnp.float32) - mean * scale

    if S % 128 == 0:
        # Per-row view (N*C, H*W): rows carry channel params, lanes are dense.
        scale_rows = jnp.tile(scale, (N,)).reshape(R, 1)
        bias_rows = jnp.tile(bias, (N,)).reshape(R, 1)
        y2 = _bn_apply(x.reshape(R, S), scale_rows, bias_rows, scale_block="row")
    else:
        # Small / ragged spatial (7x7, 14x14, ...): flat (N, C*H*W) view with
        # per-lane channel params -> lane-dense loads and unmasked-as-possible stores.
        scale_lane = jnp.repeat(scale, S).reshape(1, C * S)
        bias_lane = jnp.repeat(bias, S).reshape(1, C * S)
        y2 = _bn_apply(x.reshape(N, C * S), scale_lane, bias_lane, scale_block="lane")

    y = y2.reshape(N, C, H, W)
    if squeeze:
        y = y[0]
    return y, new_rmean, new_rvar


# ----------------------------------------------------------------------------
# Demo / correctness check
# ----------------------------------------------------------------------------
if __name__ == "__main__":
    def bcast(v):
        return v[None, :, None, None]

    def reference(x, gamma, beta, mean, var, eps):
        return (x - bcast(mean)) * bcast(jax.lax.rsqrt(var + eps)) * bcast(gamma) + bcast(beta)

    key = jax.random.PRNGKey(0)
    kx, kg, kb, km, kv, kx2, kx3 = jax.random.split(key, 7)
    eps = 1e-5

    N, C, H, W = 2, 4, 16, 16
    x = jax.random.normal(kx, (N, C, H, W), dtype=jnp.float32) + 0.5
    gamma = 1.0 + 0.1 * jax.random.normal(kg, (C,), dtype=jnp.float32)
    beta = 0.1 * jax.random.normal(kb, (C,), dtype=jnp.float32)
    running_mean = 0.1 * jax.random.normal(km, (C,), dtype=jnp.float32)
    running_var = jax.nn.softplus(jax.random.normal(kv, (C,), dtype=jnp.float32)) + 0.5

    # --- eval mode (running stats), lane-aligned spatial (S % 128 == 0) ---
    y_eval, rm, rv = vmap_batch_norm_forward(
        x, gamma, beta, running_mean, running_var, eps=eps, training=False)
    y_eval = jax.block_until_ready(y_eval)
    ref_eval = reference(x, gamma, beta, running_mean, running_var, eps)
    assert y_eval.shape == x.shape and y_eval.dtype == x.dtype
    assert jnp.allclose(y_eval, ref_eval, atol=1e-5, rtol=1e-5), "eval mismatch"
    assert rm.dtype == running_mean.dtype and rv.dtype == running_var.dtype

    # --- training mode (batch statistics computed in-kernel) ---
    y_tr, new_rm, new_rv = vmap_batch_norm_forward(
        x, gamma, beta, running_mean, running_var, eps=eps, training=True)
    y_tr = jax.block_until_ready(y_tr)
    bmean = x.mean(axis=(0, 2, 3))
    bvar = x.var(axis=(0, 2, 3))
    ref_tr = reference(x, gamma, beta, bmean, bvar, eps)
    assert jnp.allclose(y_tr, ref_tr, atol=1e-4, rtol=1e-4), "training mismatch"
    cnt = N * H * W
    ref_rv = (1 - 0.1) * running_var + 0.1 * bvar * cnt / (cnt - 1)
    assert jnp.allclose(new_rm, (1 - 0.1) * running_mean + 0.1 * bmean,
                        atol=1e-5, rtol=1e-5), "running-mean mismatch"
    assert jnp.allclose(new_rv, ref_rv, atol=1e-4, rtol=1e-4), "running-var mismatch"

    # --- small spatial (7x7): exercises the lane-dense flat apply path ---
    x7 = jax.random.normal(kx2, (2, 4, 7, 7), dtype=jnp.float32) - 0.3
    y7e, _, _ = vmap_batch_norm_forward(
        x7, gamma, beta, running_mean, running_var, eps=eps, training=False)
    y7e = jax.block_until_ready(y7e)
    assert jnp.allclose(y7e, reference(x7, gamma, beta, running_mean, running_var, eps),
                        atol=1e-5, rtol=1e-5), "7x7 eval mismatch"
    y7t, _, _ = vmap_batch_norm_forward(
        x7, gamma, beta, running_mean, running_var, eps=eps, training=True)
    y7t = jax.block_until_ready(y7t)
    assert jnp.allclose(
        y7t, reference(x7, gamma, beta, x7.mean(axis=(0, 2, 3)), x7.var(axis=(0, 2, 3)), eps),
        atol=1e-4, rtol=1e-4), "7x7 training mismatch"

    # --- large ragged spatial (100x100 > stats block): exercises tail-masked stats ---
    xr = jax.random.normal(kx3, (1, 2, 100, 100), dtype=jnp.float32) + 1.0
    g2, b2 = gamma[:2], beta[:2]
    rm2, rv2 = running_mean[:2], running_var[:2]
    yrt, _, _ = vmap_batch_norm_forward(xr, g2, b2, rm2, rv2, eps=eps, training=True)
    yrt = jax.block_until_ready(yrt)
    assert jnp.allclose(
        yrt, reference(xr, g2, b2, xr.mean(axis=(0, 2, 3)), xr.var(axis=(0, 2, 3)), eps),
        atol=1e-4, rtol=1e-4), "ragged-stats training mismatch"

    # --- VmapBatchNorm fallback: unbatched (C, H, W) input in eval mode ---
    x3 = x[0]
    y3, _, _ = vmap_batch_norm_forward(
        x3, gamma, beta, running_mean, running_var, eps=eps, training=False)
    y3 = jax.block_until_ready(y3)
    assert y3.shape == x3.shape
    assert jnp.allclose(y3, ref_eval[0], atol=1e-5, rtol=1e-5), "vmap-fallback mismatch"

    print("KERNEL_OK")
</pallas_src>

<mosaic_0001>
module attributes {stable_mosaic.version = 11 : i64} {
  func.func @_bn_apply_kernel(%arg0: i32, %arg1: i32, %arg2: memref<8x256xf32, #tpu.memory_space<vmem>>, %arg3: memref<8x1xf32, #tpu.memory_space<vmem>>, %arg4: memref<8x1xf32, #tpu.memory_space<vmem>>, %arg5: memref<8x256xf32, #tpu.memory_space<vmem>>) attributes {dimension_semantics = [#tpu.dimension_semantics<parallel>, #tpu.dimension_semantics<parallel>], iteration_bounds = array<i64: 1, 1>, scalar_prefetch = 0 : i64, scratch_operands = 0 : i64, tpu.core_type = #tpu.core_type<tc>, window_params = [{transform_indices = @transform_0, window_bounds = array<i64: 8, 256>}, {transform_indices = @transform_1, window_bounds = array<i64: 8, 1>}, {transform_indices = @transform_2, window_bounds = array<i64: 8, 1>}, {transform_indices = @transform_3, window_bounds = array<i64: 8, 256>}]} {
    %c0 = arith.constant 0 : index
    %c0_0 = arith.constant 0 : index
    %0 = vector.load %arg2[%c0, %c0_0] : memref<8x256xf32, #tpu.memory_space<vmem>>, vector<8x256xf32>
    %c0_1 = arith.constant 0 : index
    %c0_2 = arith.constant 0 : index
    %1 = vector.load %arg3[%c0_1, %c0_2] : memref<8x1xf32, #tpu.memory_space<vmem>>, vector<8x1xf32>
    %2 = vector.broadcast %1 : vector<8x1xf32> to vector<8x256xf32>
    %3 = arith.mulf %0, %2 : vector<8x256xf32>
    %c0_3 = arith.constant 0 : index
    %c0_4 = arith.constant 0 : index
    %4 = vector.load %arg4[%c0_3, %c0_4] : memref<8x1xf32, #tpu.memory_space<vmem>>, vector<8x1xf32>
    %5 = vector.broadcast %4 : vector<8x1xf32> to vector<8x256xf32>
    %6 = arith.addf %3, %5 : vector<8x256xf32>
    %c0_5 = arith.constant 0 : index
    %c0_6 = arith.constant 0 : index
    %7 = vector.load %arg5[%c0_5, %c0_6] : memref<8x256xf32, #tpu.memory_space<vmem>>, vector<8x256xf32>
    tpu.vector_store %arg5[%c0_5, %c0_6], %6 {strides = array<i32>} : memref<8x256xf32, #tpu.memory_space<vmem>>, vector<8x256xf32>,
    return
  }
  func.func @transform_0(%arg0: i32, %arg1: i32) -> (i32, i32) {
    %c0_i32 = arith.constant 0 : i32
    return %arg0, %arg1 : i32, i32
  }
  func.func @transform_1(%arg0: i32, %arg1: i32) -> (i32, i32) {
    %c0_i32 = arith.constant 0 : i32
    %c0_i32_0 = arith.constant 0 : i32
    return %arg0, %c0_i32 : i32, i32
  }
  func.func @transform_2(%arg0: i32, %arg1: i32) -> (i32, i32) {
    %c0_i32 = arith.constant 0 : i32
    %c0_i32_0 = arith.constant 0 : i32
    return %arg0, %c0_i32 : i32, i32
  }
  func.func @transform_3(%arg0: i32, %arg1: i32) -> (i32, i32) {
    %c0_i32 = arith.constant 0 : i32
    return %arg0, %arg1 : i32, i32
  }
}

</mosaic_0001>

<llo_original>
// kernel: tpu_custom_call.1
$region0: #{tpu_custom_call.1}
  #allocation0 [shape = 'u32[]', space=smem, size = 0x4, offset = 0x4, fixed_abs, tag = 'smem constant byte address 0x4 - core index']
  #allocation1 [shape = 'u32[144,128]{1,0:T(1,128)}', space=vmem, size = 0x12000, scoped, tag = 'internal scratch']
  %s0 = inlined_call_operand.vmem [shape: f32[8,256], index: 0, kind: input, shape index: {}]
  %s1 = inlined_call_operand.vmem [shape: f32[8,1], index: 1, kind: input, shape index: {}]
  %s2 = inlined_call_operand.vmem [shape: f32[8,1], index: 2, kind: input, shape index: {}]
  %s3 = inlined_call_operand.hbm [shape: f32[8,256], index: 3, kind: output, shape index: {}]
  %s4 = sld [smem:[#allocation0]]
  $region22: #{tpu_custom_call.1} parent=0
    _
  %s6 = ssub.s32 1, %s4
  %s7 = scalar_select 0, %s6, %s4
  $region1: #{tpu_custom_call.1} parent=0
    #allocation2 [shape = 'u8[8192]{0}', space=vmem, size = 0x2000, scoped, tag = 'output window, operand 0, single buffered']
    #allocation3 [shape = 's32[1]{0}', space=sflag, size = 0x4, scoped, tag = 'scoped memory for tpu_custom_call.1']
    %8 = vsyncpa [#allocation3], 0
    // Predicated region
    $region2: #{tpu_custom_call.1} parent=1 // pred_check
      _
    $region3: #{tpu_custom_call.1} parent=1 // pred_check_branch
      %10 = sbr.rel (0) target = $region5
    $region4: #{tpu_custom_call.1} parent=1 // pred_region
      _
    $region5: #{tpu_custom_call.1} parent=1 // pred_fallthru
      _
    // Predicated region
    $region6: #{tpu_custom_call.1} parent=1 // pred_check
      _
    $region7: #{tpu_custom_call.1} parent=1 // pred_check_branch
      %12 = sbr.rel (0) target = $region9
    $region8: #{tpu_custom_call.1} parent=1 // pred_region
      _
    $region9: #{tpu_custom_call.1} parent=1 // pred_fallthru
      _
    // Predicated region
    $region10: #{tpu_custom_call.1} parent=1 // pred_check
      _
    $region11: #{tpu_custom_call.1} parent=1 // pred_check_branch
      %14 = sbr.rel (0) target = $region13
    $region12: #{tpu_custom_call.1} parent=1 // pred_region
      _
    $region13: #{tpu_custom_call.1} parent=1 // pred_fallthru
      _
    %v15 = vld [vmem:[%s0] sm:$0xff]
    %v16 = vld [vmem:[%s0 + $0x8] sm:$0xff]
    %v17 = vld [vmem:[%s1] sm:$0xff]
    %19 = vset.pattern.permute.xlu0 0
    %20 = vperm.xlu0 %19, %v17
    %v21 = vpop.permute.xlu0 %20
    %v23 = vmul.f32 %v15, %v21
    %v24 = vmul.f32 %v16, %v21
    %v25 = vld [vmem:[%s2] sm:$0xff]
    %27 = vset.pattern.permute.xlu0 0
    %28 = vperm.xlu0 %27, %v25
    %v29 = vpop.permute.xlu0 %28
    %v31 = vadd.f32 %v23, %v29
    %v32 = vadd.f32 %v24, %v29
    %33 = vst [vmem:[#allocation2] sm:$0xff] %v31
    %34 = vst [vmem:[#allocation2 + $0x8] sm:$0xff] %v32
    // Predicated region
    $region14: #{tpu_custom_call.1} parent=1 // pred_check
      _
    $region15: #{tpu_custom_call.1} parent=1 // pred_check_branch
      %36 = sbr.rel (0) target = $region17
    $region16: #{tpu_custom_call.1} parent=1 // pred_region
      %s38 = ssub.s32 256, 256
      %39 = vsyncadd [#allocation3], %s38
      %s41 = sshll.u32 [#allocation2], 4
      %s42 = int_to_ptr.vmem [resolvable:$true] %s41
      %44 = dma.vmem_to_hbm [thread:$0]  %s42, 256, %s3, [#allocation3]
    $region17: #{tpu_custom_call.1} parent=1 // pred_fallthru
      _
    // Predicated region
    $region18: #{tpu_custom_call.1} parent=1 // pred_check
      _
    $region19: #{tpu_custom_call.1} parent=1 // pred_check_branch
      %46 = sbr.rel (0) target = $region21
    $region20: #{tpu_custom_call.1} parent=1 // pred_region
      %47 = dma.done [#allocation3], 256
    $region21: #{tpu_custom_call.1} parent=1 // pred_fallthru
      _
    %48 = vsyncpa [#allocation3], 1

</llo_original>
